<compile_context>
chip_gen: v6e
topology: v6e:2x2x1
jax: 0.10.0
libtpu: 0.0.40
codegen_flags: <defaults>
</compile_context>

<pallas_src>
import jax
import jax.numpy as jnp
from jax import lax
from jax.experimental import pallas as pl
from jax.experimental.pallas import tpu as pltpu


# ---------------------------------------------------------------------------
# Pallas kernel: one image per grid step, everything fused.
# ---------------------------------------------------------------------------

def bottleneck_kernel(x_ref, w1_ref, w2_ref, w3_ref, b1_ref, b2_ref, b3_ref,
                      o_ref):
    # x_ref: (1, H, W*Cin) f32 -- one image, (W, C) packed on the lane axis.
    _, H, WCin = x_ref.shape
    x = x_ref[...].reshape(H, WCin)                  # f32, kept for residual
    x_bf = x.astype(jnp.bfloat16)

    # conv1 (1x1, Cin->P) + bn1 + relu: block-diagonal matmul, BN scale folded.
    h1 = jnp.dot(x_bf, w1_ref[...], preferred_element_type=jnp.float32)
    h1 = jnp.maximum(h1 + b1_ref[...], 0.0)          # (H, W*P) f32
    h1 = h1.astype(jnp.bfloat16)

    # conv2 (3x3, pad=1) + bn2 + relu as ONE matmul:
    #   kx taps baked into the banded weight (host side, handles W padding);
    #   ky taps via zero-padded row shifts of h1, concatenated along K (im2col).
    zrow = jnp.zeros((1, h1.shape[1]), jnp.bfloat16)
    up = jnp.concatenate([zrow, h1[:-1, :]], axis=0)  # output row h sees h-1
    dn = jnp.concatenate([h1[1:, :], zrow], axis=0)   # output row h sees h+1
    op = jnp.concatenate([up, h1, dn], axis=1)        # (H, 3*W*P)
    h2 = jnp.dot(op, w2_ref[...], preferred_element_type=jnp.float32)
    h2 = jnp.maximum(h2 + b2_ref[...], 0.0)           # (H, W*P) f32
    h2 = h2.astype(jnp.bfloat16)

    # conv3 (1x1, P->4P) + bn3, residual add and final relu in f32.
    h3 = jnp.dot(h2, w3_ref[...], preferred_element_type=jnp.float32)
    out = jnp.maximum(h3 + b3_ref[...] + x, 0.0)      # (H, W*Cout)
    o_ref[...] = out.reshape(o_ref.shape)             # lane-dense (256) store


def bottleneck_forward(x_nchw, kparams):
    """x_nchw: (N, Cin, H, W) f32; kparams: output of to_kernel_layout."""
    w1_big, w2_big, w3_big, b1t, b2t, b3t = kparams
    N, Cin, H, W = x_nchw.shape
    Cout = w3_big.shape[1] // W
    assert Cout == Cin, "residual add requires inplanes == planes * expansion"

    # NCHW -> NHWC -> (N, H, W*Cin): channels-last, (W, C) packed on lanes.
    x = jnp.transpose(x_nchw, (0, 2, 3, 1)).astype(jnp.float32)
    x = x.reshape(N, H, W * Cin)

    out = pl.pallas_call(
        bottleneck_kernel,
        out_shape=jax.ShapeDtypeStruct((N, H, W * Cout), jnp.float32),
        grid=(N,),
        in_specs=[
            pl.BlockSpec((1, H, W * Cin), lambda n: (n, 0, 0)),
            pl.BlockSpec(w1_big.shape, lambda n: (0, 0)),
            pl.BlockSpec(w2_big.shape, lambda n: (0, 0)),
            pl.BlockSpec(w3_big.shape, lambda n: (0, 0)),
            pl.BlockSpec(b1t.shape, lambda n: (0, 0)),
            pl.BlockSpec(b2t.shape, lambda n: (0, 0)),
            pl.BlockSpec(b3t.shape, lambda n: (0, 0)),
        ],
        out_specs=pl.BlockSpec((1, H, W * Cout), lambda n: (n, 0, 0)),
        compiler_params=pltpu.CompilerParams(
            dimension_semantics=("parallel",)),
    )(x, w1_big, w2_big, w3_big, b1t, b2t, b3t)

    return jnp.transpose(out.reshape(N, H, W, Cout), (0, 3, 1, 2))  # -> NCHW


# ---------------------------------------------------------------------------
# Deterministic parameter construction + host-side weight packing (glue).
# ---------------------------------------------------------------------------

def dense_shift_quant(w):
    # TODO(synk): exact DenseShiftConv2d8bit quantizer source not available;
    # project weights to signed powers of two as a stand-in (exact in bf16).
    mag = jnp.maximum(jnp.abs(w), 1e-8)
    return jnp.sign(w) * jnp.exp2(jnp.round(jnp.log2(mag)))


def conv_weight(key, cout, cin, kh, kw):
    fan_in = cin * kh * kw
    w = jax.random.normal(key, (cout, cin, kh, kw), jnp.float32) * (2.0 / fan_in) ** 0.5
    return dense_shift_quant(w)  # PyTorch OIHW layout


def bn_fold(keys, c, eps=1e-5):
    kg, kb, km, kv = keys
    gamma = jax.random.uniform(kg, (c,), jnp.float32, 0.5, 1.5)
    beta = jax.random.normal(kb, (c,), jnp.float32) * 0.1
    mean = jax.random.normal(km, (c,), jnp.float32) * 0.1
    var = jax.random.uniform(kv, (c,), jnp.float32, 0.5, 1.5)
    scale = gamma / jnp.sqrt(var + eps)
    bias = beta - mean * scale
    return scale, bias


def make_params(key, inplanes, planes):
    expansion = 4
    ks = jax.random.split(key, 15)
    w1_t = conv_weight(ks[0], planes, inplanes, 1, 1)            # OIHW
    w2_t = conv_weight(ks[1], planes, planes, 3, 3)              # OIHW
    w3_t = conv_weight(ks[2], planes * expansion, planes, 1, 1)  # OIHW
    s1, b1 = bn_fold(ks[3:7], planes)
    s2, b2 = bn_fold(ks[7:11], planes)
    s3, b3 = bn_fold(ks[11:15], planes * expansion)
    return (w1_t, w2_t, w3_t, s1, b1, s2, b2, s3, b3)


def fold_bn(params):
    """Fold eval-mode BN scales into conv weights; keep per-channel biases."""
    w1_t, w2_t, w3_t, s1, b1, s2, b2, s3, b3 = params
    w1 = w1_t[:, :, 0, 0].T * s1[None, :]                 # (Cin, P)
    w2 = jnp.transpose(w2_t, (2, 3, 1, 0)) * s2            # (3, 3, P, P) HWIO
    w3 = w3_t[:, :, 0, 0].T * s3[None, :]                  # (P, Cout)
    return w1, w2, w3, b1, b2, b3


def to_kernel_layout(folded, W):
    """Build the lane-packed (W*C) weight matrices consumed by the kernel."""
    w1, w2, w3, b1, b2, b3 = folded
    Cin, P = w1.shape
    Cout = w3.shape[1]
    eye = jnp.eye(W, dtype=jnp.float32)

    # 1x1 convs -> block-diagonal matmuls over the (W*C) lane axis.
    w1_big = jnp.kron(eye, w1)                              # (W*Cin, W*P)
    w3_big = jnp.kron(eye, w3)                              # (W*P,  W*Cout)

    # 3x3 conv: kx taps -> banded blocks (implicit W-direction zero padding);
    # ky taps stacked along the contraction axis to match the in-kernel im2col.
    w2_big = jnp.concatenate([
        sum(jnp.kron(jnp.eye(W, k=1 - kx, dtype=jnp.float32), w2[ky, kx])
            for kx in range(3))
        for ky in range(3)], axis=0)                        # (3*W*P, W*P)

    b1t = jnp.tile(b1, W).reshape(1, W * P)
    b2t = jnp.tile(b2, W).reshape(1, W * P)
    b3t = jnp.tile(b3, W).reshape(1, W * Cout)

    return (w1_big.astype(jnp.bfloat16), w2_big.astype(jnp.bfloat16),
            w3_big.astype(jnp.bfloat16), b1t, b2t, b3t)


# ---------------------------------------------------------------------------
# Pure-JAX references (for correctness checks only).
# ---------------------------------------------------------------------------

def ref_forward_f32(x_nchw, params):
    """Full-f32 reference of the original module (eval-mode BN)."""
    w1_t, w2_t, w3_t, s1, b1, s2, b2, s3, b3 = params
    x = jnp.transpose(x_nchw, (0, 2, 3, 1)).astype(jnp.float32)

    def conv(h, w_t, pad):
        w = jnp.transpose(w_t, (2, 3, 1, 0))  # OIHW -> HWIO
        return lax.conv_general_dilated(
            h, w, (1, 1), [(pad, pad), (pad, pad)],
            dimension_numbers=('NHWC', 'HWIO', 'NHWC'))

    h = jnp.maximum(conv(x, w1_t, 0) * s1 + b1, 0.0)
    h = jnp.maximum(conv(h, w2_t, 1) * s2 + b2, 0.0)
    h = conv(h, w3_t, 0) * s3 + b3
    out = jnp.maximum(h + x, 0.0)
    return jnp.transpose(out, (0, 3, 1, 2))


def ref_forward_mixed(x_nchw, folded):
    """Reference with the kernel's numerics: bf16 conv operands (BN scales
    folded into weights), f32 accumulation / bias / relu / residual add."""
    w1, w2, w3, b1, b2, b3 = folded
    x = jnp.transpose(x_nchw, (0, 2, 3, 1)).astype(jnp.float32)

    def conv(h, w_hwio, pad):
        return lax.conv_general_dilated(
            h.astype(jnp.bfloat16), w_hwio.astype(jnp.bfloat16),
            (1, 1), [(pad, pad), (pad, pad)],
            dimension_numbers=('NHWC', 'HWIO', 'NHWC'),
            preferred_element_type=jnp.float32)

    h = jnp.maximum(conv(x, w1[None, None], 0) + b1, 0.0)
    h = jnp.maximum(conv(h, w2, 1) + b2, 0.0)
    h = conv(h, w3[None, None], 0) + b3
    out = jnp.maximum(h + x, 0.0)
    return jnp.transpose(out, (0, 3, 1, 2))


if __name__ == "__main__":
    key = jax.random.PRNGKey(0)
    k_x, k_p = jax.random.split(key)

    N, inplanes, H, W = 2, 16, 16, 16
    planes = 4  # expansion=4 -> Cout = 16 = inplanes (downsample=None)

    x = jax.random.normal(k_x, (N, inplanes, H, W), jnp.float32)
    params = make_params(k_p, inplanes, planes)
    folded = fold_bn(params)
    kparams = to_kernel_layout(folded, W)

    out = jax.block_until_ready(bottleneck_forward(x, kparams))
    assert out.shape == (N, planes * 4, H, W)

    # Tight check vs a reference with identical numerics (bf16 operands, f32
    # accumulation): validates the banded/block-diagonal weight packing, the
    # row shifts (H padding), biases and residual path.
    ref_mixed = jax.block_until_ready(ref_forward_mixed(x, folded))
    assert jnp.allclose(out, ref_mixed, rtol=1e-3, atol=1e-3), \
        "mismatch vs mixed-precision reference"

    # Loose sanity check vs the full-f32 module reference (only difference is
    # bf16 rounding of the matmul operands).
    ref32 = jax.block_until_ready(ref_forward_f32(x, params))
    rel = jnp.max(jnp.abs(out - ref32)) / jnp.maximum(jnp.max(jnp.abs(ref32)), 1.0)
    assert float(rel) < 0.1, f"too far from f32 reference: {float(rel)}"

    print("KERNEL_OK")
</pallas_src>

<mosaic_0001>
module attributes {stable_mosaic.version = 11 : i64} {
  func.func @bottleneck_kernel(%arg0: i32, %arg1: memref<1x16x256xf32, #tpu.memory_space<vmem>>, %arg2: memref<256x64xbf16, #tpu.memory_space<vmem>>, %arg3: memref<192x64xbf16, #tpu.memory_space<vmem>>, %arg4: memref<64x256xbf16, #tpu.memory_space<vmem>>, %arg5: memref<1x64xf32, #tpu.memory_space<vmem>>, %arg6: memref<1x64xf32, #tpu.memory_space<vmem>>, %arg7: memref<1x256xf32, #tpu.memory_space<vmem>>, %arg8: memref<1x16x256xf32, #tpu.memory_space<vmem>>) attributes {dimension_semantics = [#tpu.dimension_semantics<parallel>], iteration_bounds = array<i64: 2>, scalar_prefetch = 0 : i64, scratch_operands = 0 : i64, tpu.core_type = #tpu.core_type<tc>, window_params = [{transform_indices = @transform_0, window_bounds = array<i64: 1, 16, 256>}, {pipeline_mode = #tpu.pipeline_mode<synchronous>, transform_indices = @transform_1, window_bounds = array<i64: 256, 64>}, {pipeline_mode = #tpu.pipeline_mode<synchronous>, transform_indices = @transform_2, window_bounds = array<i64: 192, 64>}, {pipeline_mode = #tpu.pipeline_mode<synchronous>, transform_indices = @transform_3, window_bounds = array<i64: 64, 256>}, {pipeline_mode = #tpu.pipeline_mode<synchronous>, transform_indices = @transform_4, window_bounds = array<i64: 1, 64>}, {pipeline_mode = #tpu.pipeline_mode<synchronous>, transform_indices = @transform_5, window_bounds = array<i64: 1, 64>}, {pipeline_mode = #tpu.pipeline_mode<synchronous>, transform_indices = @transform_6, window_bounds = array<i64: 1, 256>}, {transform_indices = @transform_7, window_bounds = array<i64: 1, 16, 256>}]} {
    %c0 = arith.constant 0 : index
    %c0_0 = arith.constant 0 : index
    %c0_1 = arith.constant 0 : index
    %0 = vector.load %arg1[%c0, %c0_0, %c0_1] : memref<1x16x256xf32, #tpu.memory_space<vmem>>, vector<1x16x256xf32>
    %1 = vector.shape_cast %0 : vector<1x16x256xf32> to vector<16x256xf32>
    %2 = arith.truncf %1 : vector<16x256xf32> to vector<16x256xbf16>
    %c0_2 = arith.constant 0 : index
    %c0_3 = arith.constant 0 : index
    %3 = vector.load %arg2[%c0_2, %c0_3] : memref<256x64xbf16, #tpu.memory_space<vmem>>, vector<256x64xbf16>
    %cst = arith.constant dense<0.000000e+00> : vector<16x64xf32>
    %4 = tpu.matmul %2, %3, %cst {dimension_numbers = #tpu.dot_dimension_numbers<[1], [0], [0], [1], [0, 0, 1, 1], [], []>} : vector<16x256xbf16>, vector<256x64xbf16>, vector<16x64xf32> -> vector<16x64xf32>
    %c0_4 = arith.constant 0 : index
    %c0_5 = arith.constant 0 : index
    %5 = vector.load %arg5[%c0_4, %c0_5] : memref<1x64xf32, #tpu.memory_space<vmem>>, vector<1x64xf32>
    %6 = vector.broadcast %5 : vector<1x64xf32> to vector<16x64xf32>
    %7 = arith.addf %4, %6 : vector<16x64xf32>
    %cst_6 = arith.constant 0.000000e+00 : f32
    %8 = vector.broadcast %cst_6 : f32 to vector<16x64xf32>
    %9 = arith.maximumf %7, %8 : vector<16x64xf32>
    %10 = arith.truncf %9 : vector<16x64xf32> to vector<16x64xbf16>
    %cst_7 = arith.constant 0.000000e+00 : bf16
    %11 = vector.broadcast %cst_7 : bf16 to vector<1x64xbf16>
    %12 = vector.extract_strided_slice %10 {offsets = [0, 0], sizes = [15, 64], strides = [1, 1]} : vector<16x64xbf16> to vector<15x64xbf16>
    %13 = tpu.concatenate %11, %12 in 0 : vector<1x64xbf16>, vector<15x64xbf16> -> vector<16x64xbf16>
    %14 = vector.extract_strided_slice %10 {offsets = [1, 0], sizes = [15, 64], strides = [1, 1]} : vector<16x64xbf16> to vector<15x64xbf16>
    %15 = tpu.concatenate %14, %11 in 0 : vector<15x64xbf16>, vector<1x64xbf16> -> vector<16x64xbf16>
    %16 = tpu.concatenate %13, %10, %15 in 1 : vector<16x64xbf16>, vector<16x64xbf16>, vector<16x64xbf16> -> vector<16x192xbf16>
    %c0_8 = arith.constant 0 : index
    %c0_9 = arith.constant 0 : index
    %17 = vector.load %arg3[%c0_8, %c0_9] : memref<192x64xbf16, #tpu.memory_space<vmem>>, vector<192x64xbf16>
    %cst_10 = arith.constant dense<0.000000e+00> : vector<16x64xf32>
    %18 = tpu.matmul %16, %17, %cst_10 {dimension_numbers = #tpu.dot_dimension_numbers<[1], [0], [0], [1], [0, 0, 1, 1], [], []>} : vector<16x192xbf16>, vector<192x64xbf16>, vector<16x64xf32> -> vector<16x64xf32>
    %c0_11 = arith.constant 0 : index
    %c0_12 = arith.constant 0 : index
    %19 = vector.load %arg6[%c0_11, %c0_12] : memref<1x64xf32, #tpu.memory_space<vmem>>, vector<1x64xf32>
    %20 = vector.broadcast %19 : vector<1x64xf32> to vector<16x64xf32>
    %21 = arith.addf %18, %20 : vector<16x64xf32>
    %cst_13 = arith.constant 0.000000e+00 : f32
    %22 = vector.broadcast %cst_13 : f32 to vector<16x64xf32>
    %23 = arith.maximumf %21, %22 : vector<16x64xf32>
    %24 = arith.truncf %23 : vector<16x64xf32> to vector<16x64xbf16>
    %c0_14 = arith.constant 0 : index
    %c0_15 = arith.constant 0 : index
    %25 = vector.load %arg4[%c0_14, %c0_15] : memref<64x256xbf16, #tpu.memory_space<vmem>>, vector<64x256xbf16>
    %cst_16 = arith.constant dense<0.000000e+00> : vector<16x256xf32>
    %26 = tpu.matmul %24, %25, %cst_16 {dimension_numbers = #tpu.dot_dimension_numbers<[1], [0], [0], [1], [0, 0, 1, 1], [], []>} : vector<16x64xbf16>, vector<64x256xbf16>, vector<16x256xf32> -> vector<16x256xf32>
    %c0_17 = arith.constant 0 : index
    %c0_18 = arith.constant 0 : index
    %27 = vector.load %arg7[%c0_17, %c0_18] : memref<1x256xf32, #tpu.memory_space<vmem>>, vector<1x256xf32>
    %28 = vector.broadcast %27 : vector<1x256xf32> to vector<16x256xf32>
    %29 = arith.addf %26, %28 : vector<16x256xf32>
    %30 = arith.addf %29, %1 : vector<16x256xf32>
    %cst_19 = arith.constant 0.000000e+00 : f32
    %31 = vector.broadcast %cst_19 : f32 to vector<16x256xf32>
    %32 = arith.maximumf %30, %31 : vector<16x256xf32>
    %33 = vector.shape_cast %32 : vector<16x256xf32> to vector<1x16x256xf32>
    %c0_20 = arith.constant 0 : index
    %c0_21 = arith.constant 0 : index
    %c0_22 = arith.constant 0 : index
    %34 = vector.load %arg8[%c0_20, %c0_21, %c0_22] : memref<1x16x256xf32, #tpu.memory_space<vmem>>, vector<1x16x256xf32>
    tpu.vector_store %arg8[%c0_20, %c0_21, %c0_22], %33 {strides = array<i32>} : memref<1x16x256xf32, #tpu.memory_space<vmem>>, vector<1x16x256xf32>,
    return
  }
  func.func @transform_0(%arg0: i32) -> (i32, i32, i32) {
    %c0_i32 = arith.constant 0 : i32
    %c0_i32_0 = arith.constant 0 : i32
    %c0_i32_1 = arith.constant 0 : i32
    return %arg0, %c0_i32, %c0_i32_0 : i32, i32, i32
  }
  func.func @transform_1(%arg0: i32) -> (i32, i32) {
    %c0_i32 = arith.constant 0 : i32
    %c0_i32_0 = arith.constant 0 : i32
    %c0_i32_1 = arith.constant 0 : i32
    return %c0_i32, %c0_i32_0 : i32, i32
  }
  func.func @transform_2(%arg0: i32) -> (i32, i32) {
    %c0_i32 = arith.constant 0 : i32
    %c0_i32_0 = arith.constant 0 : i32
    %c0_i32_1 = arith.constant 0 : i32
    return %c0_i32, %c0_i32_0 : i32, i32
  }
  func.func @transform_3(%arg0: i32) -> (i32, i32) {
    %c0_i32 = arith.constant 0 : i32
    %c0_i32_0 = arith.constant 0 : i32
    %c0_i32_1 = arith.constant 0 : i32
    return %c0_i32, %c0_i32_0 : i32, i32
  }
  func.func @transform_4(%arg0: i32) -> (i32, i32) {
    %c0_i32 = arith.constant 0 : i32
    %c0_i32_0 = arith.constant 0 : i32
    %c0_i32_1 = arith.constant 0 : i32
    return %c0_i32, %c0_i32_0 : i32, i32
  }
  func.func @transform_5(%arg0: i32) -> (i32, i32) {
    %c0_i32 = arith.constant 0 : i32
    %c0_i32_0 = arith.constant 0 : i32
    %c0_i32_1 = arith.constant 0 : i32
    return %c0_i32, %c0_i32_0 : i32, i32
  }
  func.func @transform_6(%arg0: i32) -> (i32, i32) {
    %c0_i32 = arith.constant 0 : i32
    %c0_i32_0 = arith.constant 0 : i32
    %c0_i32_1 = arith.constant 0 : i32
    return %c0_i32, %c0_i32_0 : i32, i32
  }
  func.func @transform_7(%arg0: i32) -> (i32, i32, i32) {
    %c0_i32 = arith.constant 0 : i32
    %c0_i32_0 = arith.constant 0 : i32
    %c0_i32_1 = arith.constant 0 : i32
    return %arg0, %c0_i32, %c0_i32_0 : i32, i32, i32
  }
}

</mosaic_0001>

<llo_original>
// kernel: tpu_custom_call.1
$region0: #{tpu_custom_call.1}
  #allocation0 [shape = 'u32[]', space=smem, size = 0x4, offset = 0x4, fixed_abs, tag = 'smem constant byte address 0x4 - core index']
  #allocation1 [shape = 'u32[144,128]{1,0:T(1,128)}', space=vmem, size = 0x12000, scoped, tag = 'internal scratch']
  %s0 = inlined_call_operand.vmem [shape: f32[2,16,256], index: 0, kind: input, shape index: {}]
  %s1 = inlined_call_operand.vmem [shape: bf16[256,64], index: 1, kind: input, shape index: {}]
  %s2 = inlined_call_operand.vmem [shape: bf16[192,64], index: 2, kind: input, shape index: {}]
  %s3 = inlined_call_operand.vmem [shape: bf16[64,256], index: 3, kind: input, shape index: {}]
  %s4 = inlined_call_operand.vmem [shape: f32[1,64], index: 4, kind: input, shape index: {}]
  %s5 = inlined_call_operand.vmem [shape: f32[1,64], index: 5, kind: input, shape index: {}]
  %s6 = inlined_call_operand.vmem [shape: f32[1,256], index: 6, kind: input, shape index: {}]
  %s7 = inlined_call_operand.hbm [shape: f32[2,16,256], index: 7, kind: output, shape index: {}]
  %s8 = sld [smem:[#allocation0]]
  $region61: #{tpu_custom_call.1} parent=0
    _
  %s10 = ssub.s32 1, %s8
  %s11 = scalar_select 0, %s10, %s8
  $region1: #{tpu_custom_call.1} parent=0
    #allocation2 [shape = 'u8[32768]{0}', space=vmem, size = 0x8000, scoped, tag = 'output window, operand 0']
    #allocation3 [shape = 's32[2]{0}', space=sflag, size = 0x8, scoped, tag = 'scoped memory for tpu_custom_call.1']
    %12 = vsyncpa [#allocation3], 0
    %s13 = scalar_lea.sflag [#allocation3], 1
    %14 = vsyncpa %s13, 0
    loop: start=0, step=1, limit=4
    $region2: #{tpu_custom_call.1} parent=1 // loop_pre_header
      _
    $region3: #{tpu_custom_call.1} parent=1 // loop_header
      %s16 = sphi 0, %s20
      %p17 = scmp.ge.s32.totalorder %s16, 4
      %s26 = sphi 0, %s28
      %s29 = sphi 0, %s26
      %s30 = sphi 0, %s29
      %s46 = sphi 0, %s30
      %s50 = sphi 0, %s50
      %s52 = sphi 0, %s50
      %s53 = sphi 0, %s52
      %s67 = sphi 0, %s53
      %s71 = sphi 0, %s71
      %s73 = sphi 0, %s71
      %s74 = sphi 0, %s73
      %s88 = sphi 0, %s74
      %s92 = sphi 0, %s92
      %s94 = sphi 0, %s92
      %s95 = sphi 0, %s94
      %s109 = sphi 0, %s95
      %s113 = sphi 0, %s113
      %s115 = sphi 0, %s113
      %s116 = sphi 0, %s115
      %s130 = sphi 0, %s116
      %s134 = sphi 0, %s134
      %s136 = sphi 0, %s134
      %s137 = sphi 0, %s136
      %s151 = sphi 0, %s137
      %s155 = sphi 0, %s155
      %s157 = sphi 0, %s155
      %s158 = sphi 0, %s157
      %s172 = sphi 0, %s158
      %s178 = sphi 0, %s180
      %s181 = sphi 0, %s178
      %s182 = sphi 0, %s181
      %s198 = sphi 0, %s182
    $region4: #{tpu_custom_call.1} parent=1 // loop_header_branch
      %19 = sbr.rel (%p17) target = $region8
    $region5: #{tpu_custom_call.1} parent=1 // loop_body
      %s21 = ssub.s32 %s16, 1
      %s22 = ssub.s32 %s16, 2
      %s23 = sadd.s32 %s16, 1
      %s24 = ssub.s32 %s16, %s23
      %p25 = scmp.eq.s32.totalorder %s24, 0
      %s27 = sadd.s32 %s26, 1
      %s28 = scalar_select %p25, %s26, %s27
      %p31 = pneg %p25
      %p32 = scmp.eq.s32.totalorder %s16, 1
      %p33 = por %p31, %p32
      %p34 = scmp.ne.s32.totalorder %s26, %s29
      %p35 = scmp.eq.s32.totalorder %s16, 0
      %p36 = por %p34, %p35
      %p37 = scmp.ne.s32.totalorder %s26, %s29
      %p38 = scmp.eq.s32.totalorder %s21, 1
      %p39 = por %p37, %p38
      %p40 = scmp.ne.s32.totalorder %s29, %s30
      %p41 = scmp.eq.s32.totalorder %s21, 0
      %p42 = por %p40, %p41
      %p43 = scmp.ne.s32.totalorder %s29, %s30
      %p44 = scmp.eq.s32.totalorder %s22, 1
      %p45 = por %p43, %p44
      %p47 = scmp.ne.s32.totalorder %s30, %s46
      %p48 = scmp.eq.s32.totalorder %s22, 0
      %p49 = por %p47, %p48
      %s51 = sadd.s32 %s50, 1
      %p54 = scmp.eq.s32.totalorder %s16, 1
      %p55 = scmp.ne.s32.totalorder %s50, %s52
      %p56 = scmp.eq.s32.totalorder %s16, 0
      %p57 = por %p55, %p56
      %p58 = scmp.ne.s32.totalorder %s50, %s52
      %p59 = scmp.eq.s32.totalorder %s21, 1
      %p60 = por %p58, %p59
      %p61 = scmp.ne.s32.totalorder %s52, %s53
      %p62 = scmp.eq.s32.totalorder %s21, 0
      %p63 = por %p61, %p62
      %p64 = scmp.ne.s32.totalorder %s52, %s53
      %p65 = scmp.eq.s32.totalorder %s22, 1
      %p66 = por %p64, %p65
      %p68 = scmp.ne.s32.totalorder %s53, %s67
      %p69 = scmp.eq.s32.totalorder %s22, 0
      %p70 = por %p68, %p69
      %s72 = sadd.s32 %s71, 1
      %p75 = scmp.eq.s32.totalorder %s16, 1
      %p76 = scmp.ne.s32.totalorder %s71, %s73
      %p77 = scmp.eq.s32.totalorder %s16, 0
      %p78 = por %p76, %p77
      %p79 = scmp.ne.s32.totalorder %s71, %s73
      %p80 = scmp.eq.s32.totalorder %s21, 1
      %p81 = por %p79, %p80
      %p82 = scmp.ne.s32.totalorder %s73, %s74
      %p83 = scmp.eq.s32.totalorder %s21, 0
      %p84 = por %p82, %p83
      %p85 = scmp.ne.s32.totalorder %s73, %s74
      %p86 = scmp.eq.s32.totalorder %s22, 1
      %p87 = por %p85, %p86
      %p89 = scmp.ne.s32.totalorder %s74, %s88
      %p90 = scmp.eq.s32.totalorder %s22, 0
      %p91 = por %p89, %p90
      %s93 = sadd.s32 %s92, 1
      %p96 = scmp.eq.s32.totalorder %s16, 1
      %p97 = scmp.ne.s32.totalorder %s92, %s94
      %p98 = scmp.eq.s32.totalorder %s16, 0
      %p99 = por %p97, %p98
      %p100 = scmp.ne.s32.totalorder %s92, %s94
      %p101 = scmp.eq.s32.totalorder %s21, 1
      %p102 = por %p100, %p101
      %p103 = scmp.ne.s32.totalorder %s94, %s95
      %p104 = scmp.eq.s32.totalorder %s21, 0
      %p105 = por %p103, %p104
      %p106 = scmp.ne.s32.totalorder %s94, %s95
      %p107 = scmp.eq.s32.totalorder %s22, 1
      %p108 = por %p106, %p107
      %p110 = scmp.ne.s32.totalorder %s95, %s109
      %p111 = scmp.eq.s32.totalorder %s22, 0
      %p112 = por %p110, %p111
      %s114 = sadd.s32 %s113, 1
      %p117 = scmp.eq.s32.totalorder %s16, 1
      %p118 = scmp.ne.s32.totalorder %s113, %s115
      %p119 = scmp.eq.s32.totalorder %s16, 0
      %p120 = por %p118, %p119
      %p121 = scmp.ne.s32.totalorder %s113, %s115
      %p122 = scmp.eq.s32.totalorder %s21, 1
      %p123 = por %p121, %p122
      %p124 = scmp.ne.s32.totalorder %s115, %s116
      %p125 = scmp.eq.s32.totalorder %s21, 0
      %p126 = por %p124, %p125
      %p127 = scmp.ne.s32.totalorder %s115, %s116
      %p128 = scmp.eq.s32.totalorder %s22, 1
      %p129 = por %p127, %p128
      %p131 = scmp.ne.s32.totalorder %s116, %s130
      %p132 = scmp.eq.s32.totalorder %s22, 0
      %p133 = por %p131, %p132
      %s135 = sadd.s32 %s134, 1
      %p138 = scmp.eq.s32.totalorder %s16, 1
      %p139 = scmp.ne.s32.totalorder %s134, %s136
      %p140 = scmp.eq.s32.totalorder %s16, 0
      %p141 = por %p139, %p140
      %p142 = scmp.ne.s32.totalorder %s134, %s136
      %p143 = scmp.eq.s32.totalorder %s21, 1
      %p144 = por %p142, %p143
      %p145 = scmp.ne.s32.totalorder %s136, %s137
      %p146 = scmp.eq.s32.totalorder %s21, 0
      %p147 = por %p145, %p146
      %p148 = scmp.ne.s32.totalorder %s136, %s137
      %p149 = scmp.eq.s32.totalorder %s22, 1
      %p150 = por %p148, %p149
      %p152 = scmp.ne.s32.totalorder %s137, %s151
      %p153 = scmp.eq.s32.totalorder %s22, 0
      %p154 = por %p152, %p153
      %s156 = sadd.s32 %s155, 1
      %p159 = scmp.eq.s32.totalorder %s16, 1
      %p160 = scmp.ne.s32.totalorder %s155, %s157
      %p161 = scmp.eq.s32.totalorder %s16, 0
      %p162 = por %p160, %p161
      %p163 = scmp.ne.s32.totalorder %s155, %s157
      %p164 = scmp.eq.s32.totalorder %s21, 1
      %p165 = por %p163, %p164
      %p166 = scmp.ne.s32.totalorder %s157, %s158
      %p167 = scmp.eq.s32.totalorder %s21, 0
      %p168 = por %p166, %p167
      %p169 = scmp.ne.s32.totalorder %s157, %s158
      %p170 = scmp.eq.s32.totalorder %s22, 1
      %p171 = por %p169, %p170
      %p173 = scmp.ne.s32.totalorder %s158, %s172
      %p174 = scmp.eq.s32.totalorder %s22, 0
      %p175 = por %p173, %p174
      %s176 = ssub.s32 %s16, %s23
      %p177 = scmp.eq.s32.totalorder %s176, 0
      %s179 = sadd.s32 %s178, 1
      %s180 = scalar_select %p177, %s178, %s179
      %p183 = pneg %p177
      %p184 = scmp.eq.s32.totalorder %s16, 1
      %p185 = por %p183, %p184
      %p186 = scmp.ne.s32.totalorder %s178, %s181
      %p187 = scmp.eq.s32.totalorder %s16, 0
      %p188 = por %p186, %p187
      %p189 = scmp.ne.s32.totalorder %s178, %s181
      %p190 = scmp.eq.s32.totalorder %s21, 1
      %p191 = por %p189, %p190
      %p192 = scmp.ne.s32.totalorder %s181, %s182
      %p193 = scmp.eq.s32.totalorder %s21, 0
      %p194 = por %p192, %p193
      %p195 = scmp.ne.s32.totalorder %s181, %s182
      %p196 = scmp.eq.s32.totalorder %s22, 1
      %p197 = por %p195, %p196
      %p199 = scmp.ne.s32.totalorder %s182, %s198
      %p200 = scmp.eq.s32.totalorder %s22, 0
      %p201 = por %p199, %p200
      %p202 = scmp.le.s32.totalorder 1, %s16
      %p203 = scmp.lt.s32.totalorder %s16, 3
      %p204 = pnand %p202, %p203
      %p205 = pneg %p204
      // Predicated region
      $region9: #{tpu_custom_call.1} parent=5 // pred_check
        _
      $region10: #{tpu_custom_call.1} parent=5 // pred_check_branch
        %207 = sbr.rel (%p204) target = $region12
      $region11: #{tpu_custom_call.1} parent=5 // pred_region
        %s208 = ssub.s32 %s16, 1
        // Predicated region
        $region13: #{tpu_custom_call.1} parent=11 // pred_check
          %p209 = pneg %p63
        $region14: #{tpu_custom_call.1} parent=11 // pred_check_branch
          %211 = sbr.rel (%p209) target = $region16
        $region15: #{tpu_custom_call.1} parent=11 // pred_region
          _
        $region16: #{tpu_custom_call.1} parent=11 // pred_fallthru
          _
        // Predicated region
        $region17: #{tpu_custom_call.1} parent=11 // pred_check
          %p212 = pneg %p84
        $region18: #{tpu_custom_call.1} parent=11 // pred_check_branch
          %214 = sbr.rel (%p212) target = $region20
        $region19: #{tpu_custom_call.1} parent=11 // pred_region
          _
        $region20: #{tpu_custom_call.1} parent=11 // pred_fallthru
          _
        // Predicated region
        $region21: #{tpu_custom_call.1} parent=11 // pred_check
          %p215 = pneg %p105
        $region22: #{tpu_custom_call.1} parent=11 // pred_check_branch
          %217 = sbr.rel (%p215) target = $region24
        $region23: #{tpu_custom_call.1} parent=11 // pred_region
          _
        $region24: #{tpu_custom_call.1} parent=11 // pred_fallthru
          _
        // Predicated region
        $region25: #{tpu_custom_call.1} parent=11 // pred_check
          %p218 = pneg %p126
        $region26: #{tpu_custom_call.1} parent=11 // pred_check_branch
          %220 = sbr.rel (%p218) target = $region28
        $region27: #{tpu_custom_call.1} parent=11 // pred_region
          _
        $region28: #{tpu_custom_call.1} parent=11 // pred_fallthru
          _
        // Predicated region
        $region29: #{tpu_custom_call.1} parent=11 // pred_check
          %p221 = pneg %p147
        $region30: #{tpu_custom_call.1} parent=11 // pred_check_branch
          %223 = sbr.rel (%p221) target = $region32
        $region31: #{tpu_custom_call.1} parent=11 // pred_region
          _
        $region32: #{tpu_custom_call.1} parent=11 // pred_fallthru
          _
        // Predicated region
        $region33: #{tpu_custom_call.1} parent=11 // pred_check
          %p224 = pneg %p168
        $region34: #{tpu_custom_call.1} parent=11 // pred_check_branch
          %226 = sbr.rel (%p224) target = $region36
        $region35: #{tpu_custom_call.1} parent=11 // pred_region
          _
        $region36: #{tpu_custom_call.1} parent=11 // pred_fallthru
          _
      $region12: #{tpu_custom_call.1} parent=5 // pred_fallthru
        _
      %p227 = scmp.lt.s32.totalorder %s16, 2
      // Predicated region
      $region37: #{tpu_custom_call.1} parent=5 // pred_check
        %p228 = pneg %p227
      $region38: #{tpu_custom_call.1} parent=5 // pred_check_branch
        %230 = sbr.rel (%p228) target = $region40
      $region39: #{tpu_custom_call.1} parent=5 // pred_region
        // Predicated region
        $region41: #{tpu_custom_call.1} parent=39 // pred_check
          %p231 = pneg %p36
        $region42: #{tpu_custom_call.1} parent=39 // pred_check_branch
          %233 = sbr.rel (%p231) target = $region44
        $region43: #{tpu_custom_call.1} parent=39 // pred_region
          %p234 = scmp.lt.s32.totalorder %s16, 1
          %s235 = scalar_select %p234, %s16, 1
          %s236 = smul.addr %s235, 4
          %s237 = smul.addr %s236, 8
          %s238 = scalar_lea.vmem %s0, %s237
        $region44: #{tpu_custom_call.1} parent=39 // pred_fallthru
          _
      $region40: #{tpu_custom_call.1} parent=5 // pred_fallthru
        _
      %p239 = scmp.le.s32.totalorder 1, %s16
      %p240 = scmp.lt.s32.totalorder %s16, 3
      %p241 = pnand %p239, %p240
      %p242 = pneg %p241
      // Predicated region
      $region45: #{tpu_custom_call.1} parent=5 // pred_check
        _
      $region46: #{tpu_custom_call.1} parent=5 // pred_check_branch
        %244 = sbr.rel (%p241) target = $region48
      $region47: #{tpu_custom_call.1} parent=5 // pred_region
        %s245 = ssub.s32 %s16, 1
        %p246 = scmp.lt.s32.totalorder %s21, 1
        %s247 = scalar_select %p246, %s21, 1
        %s248 = smul.addr %s247, 4
        %s249 = smul.addr %s248, 8
        %s250 = scalar_lea.vmem %s0, %s249
        %p251 = pneg %p42
        %p252 = pneg %p39
        %p253 = pneg %p63
        %p254 = pneg %p60
        %p255 = pneg %p84
        %p256 = pneg %p81
        %p257 = pneg %p105
        %p258 = pneg %p102
        %p259 = pneg %p126
        %p260 = pneg %p123
        %p261 = pneg %p147
        %p262 = pneg %p144
        %p263 = pneg %p168
        %p264 = pneg %p165
        %p265 = pneg %p194
        %p266 = pneg %p191
        %s267 = sand.u32 %s181, 1
        %s268 = scalar_lea.sflag [#allocation3], %s267
        %s269 = sand.u32 %s181, 1
        %s270 = smul.addr %s269, 32
        %s271 = scalar_lea.vmem [#allocation2], %s270
        %p272 = scmp.lt.s32.totalorder %s21, 1
        %s273 = scalar_select %p272, %s21, 1
        %s274 = smul.addr %s273, 4
        %s275 = smul.addr %s274, 8
        %s276 = scalar_lea.vmem %s0, %s275
        %v278 = vld [vmem:[%s276] sm:$0xff]
        %v279 = vld [vmem:[%s276 + $0x8] sm:$0xff]
        %v280 = vld [vmem:[%s276 + $0x10] sm:$0xff]
        %v281 = vld [vmem:[%s276 + $0x18] sm:$0xff]
        %v282 = vpack.c.bf16 %v280, %v278
        %v283 = vpack.c.bf16 %v281, %v279
        %v284 = vld [vmem:[%s1] sm:$0xf]
        %v285 = vld [vmem:[%s1 + $0x4] sm:$0xf]
        %v286 = vld [vmem:[%s1 + $0x8] sm:$0xf]
        %v287 = vld [vmem:[%s1 + $0xc] sm:$0xf]
        %v288 = vld [vmem:[%s1 + $0x10] sm:$0xf]
        %v289 = vld [vmem:[%s1 + $0x14] sm:$0xf]
        %v290 = vld [vmem:[%s1 + $0x18] sm:$0xf]
        %v291 = vld [vmem:[%s1 + $0x1c] sm:$0xf]
        %v292 = vld [vmem:[%s1 + $0x20] sm:$0xf]
        %v293 = vld [vmem:[%s1 + $0x24] sm:$0xf]
        %v294 = vld [vmem:[%s1 + $0x28] sm:$0xf]
        %v295 = vld [vmem:[%s1 + $0x2c] sm:$0xf]
        %v296 = vld [vmem:[%s1 + $0x30] sm:$0xf]
        %v297 = vld [vmem:[%s1 + $0x34] sm:$0xf]
        %v298 = vld [vmem:[%s1 + $0x38] sm:$0xf]
        %v299 = vld [vmem:[%s1 + $0x3c] sm:$0xf]
        %v300 = vld [vmem:[%s1 + $0x40] sm:$0xf]
        %v301 = vld [vmem:[%s1 + $0x44] sm:$0xf]
        %v302 = vld [vmem:[%s1 + $0x48] sm:$0xf]
        %v303 = vld [vmem:[%s1 + $0x4c] sm:$0xf]
        %v304 = vld [vmem:[%s1 + $0x50] sm:$0xf]
        %v305 = vld [vmem:[%s1 + $0x54] sm:$0xf]
        %v306 = vld [vmem:[%s1 + $0x58] sm:$0xf]
        %v307 = vld [vmem:[%s1 + $0x5c] sm:$0xf]
        %v308 = vld [vmem:[%s1 + $0x60] sm:$0xf]
        %v309 = vld [vmem:[%s1 + $0x64] sm:$0xf]
        %v310 = vld [vmem:[%s1 + $0x68] sm:$0xf]
        %v311 = vld [vmem:[%s1 + $0x6c] sm:$0xf]
        %v312 = vld [vmem:[%s1 + $0x70] sm:$0xf]
        %v313 = vld [vmem:[%s1 + $0x74] sm:$0xf]
        %v314 = vld [vmem:[%s1 + $0x78] sm:$0xf]
        %v315 = vld [vmem:[%s1 + $0x7c] sm:$0xf]
        %v316 = vld [vmem:[%s4] sm:$0x1]
        %v318 = vlaneseq
        %v319 = vshrl.u32 %v318, 7
        %v320 = vsub.s32 0, %v319
        %v321 = vrot.slane %v316, %v320
        %v355 = vunpack.c.l.b16 %v284
        %v356 = vunpack.c.l.b16 %v285
        %v357 = vunpack.c.l.b16 %v286
        %v358 = vunpack.c.l.b16 %v287
        %v359 = vunpack.c.l.b16 %v288
        %v360 = vunpack.c.l.b16 %v289
        %v361 = vunpack.c.l.b16 %v290
        %v362 = vunpack.c.l.b16 %v291
        %v363 = vunpack.c.l.b16 %v292
        %v364 = vunpack.c.l.b16 %v293
        %v365 = vunpack.c.l.b16 %v294
        %v366 = vunpack.c.l.b16 %v295
        %v367 = vunpack.c.l.b16 %v296
        %v368 = vunpack.c.l.b16 %v297
        %v369 = vunpack.c.l.b16 %v298
        %v370 = vunpack.c.l.b16 %v299
        %v371 = vunpack.c.l.b16 %v300
        %v372 = vunpack.c.l.b16 %v301
        %v373 = vunpack.c.l.b16 %v302
        %v374 = vunpack.c.l.b16 %v303
        %v375 = vunpack.c.l.b16 %v304
        %v376 = vunpack.c.l.b16 %v305
        %v377 = vunpack.c.l.b16 %v306
        %v378 = vunpack.c.l.b16 %v307
        %v379 = vunpack.c.l.b16 %v308
        %v380 = vunpack.c.l.b16 %v309
        %v381 = vunpack.c.l.b16 %v310
        %v382 = vunpack.c.l.b16 %v311
        %v383 = vunpack.c.l.b16 %v312
        %v384 = vunpack.c.l.b16 %v313
        %v385 = vunpack.c.l.b16 %v314
        %v386 = vunpack.c.l.b16 %v315
        %v387 = vpack.c.b16 %v356, %v355
        %v388 = vpack.c.b16 %v358, %v357
        %v389 = vpack.c.b16 %v360, %v359
        %v390 = vpack.c.b16 %v362, %v361
        %v391 = vpack.c.b16 %v364, %v363
        %v392 = vpack.c.b16 %v366, %v365
        %v393 = vpack.c.b16 %v368, %v367
        %v394 = vpack.c.b16 %v370, %v369
        %v395 = vpack.c.b16 %v372, %v371
        %v396 = vpack.c.b16 %v374, %v373
        %v397 = vpack.c.b16 %v376, %v375
        %v398 = vpack.c.b16 %v378, %v377
        %v399 = vpack.c.b16 %v380, %v379
        %v400 = vpack.c.b16 %v382, %v381
        %v401 = vpack.c.b16 %v384, %v383
        %v402 = vpack.c.b16 %v386, %v385
        %419 = vmatprep.subr.bf16.mxu0 0
        %420 = vmatpush1.bf16.msra.mxu0 %v394
        %421 = vmatprep.subr.bf16.mxu0 0
        %422 = vmatpush1.bf16.msra.mxu0 %v393
        %423 = vmatprep.subr.bf16.mxu0 0
        %424 = vmatpush1.bf16.msra.mxu0 %v392
        %425 = vmatprep.subr.bf16.mxu0 0
        %426 = vmatpush1.bf16.msra.mxu0 %v391
        %427 = vmatprep.subr.bf16.mxu0 0
        %428 = vmatpush1.bf16.msra.mxu0 %v390
        %429 = vmatprep.subr.bf16.mxu0 0
        %430 = vmatpush1.bf16.msra.mxu0 %v389
        %431 = vmatprep.subr.bf16.mxu0 0
        %432 = vmatpush1.bf16.msra.mxu0 %v388
        %433 = vmatprep.subr.bf16.mxu0 0
        %434 = vmatpush1.bf16.msra.mxu0 %v387
        %435 = vmatprep.subr.bf16.mxu0 0
        %436 = vmatpush2.bf16.msra.mxu0 %v402
        %437 = vmatprep.subr.bf16.mxu0 0
        %438 = vmatpush2.bf16.msra.mxu0 %v401
        %439 = vmatprep.subr.bf16.mxu0 0
        %440 = vmatpush2.bf16.msra.mxu0 %v400
        %441 = vmatprep.subr.bf16.mxu0 0
        %442 = vmatpush2.bf16.msra.mxu0 %v399
        %443 = vmatprep.subr.bf16.mxu0 0
        %444 = vmatpush2.bf16.msra.mxu0 %v398
        %445 = vmatprep.subr.bf16.mxu0 0
        %446 = vmatpush2.bf16.msra.mxu0 %v397
        %447 = vmatprep.subr.bf16.mxu0 0
        %448 = vmatpush2.bf16.msra.mxu0 %v396
        %449 = vmatprep.subr.bf16.mxu0 0
        %450 = vmatpush2.bf16.msra.mxu0 %v395
        %451 = vmatprep.mubr.bf16.mxu0 %v283
        %452 = vmatmul.mubr.bf16.gmra.mxu0 %v282
        %v453 = vpop.f32.mrf.mxu0
        %v454 = vadd.f32 %v321, %v453
        %v455 = vpop.f32.mrf.mxu0
        %v456 = vpop.f32.mrf.mxu0
        %v457 = vadd.f32 %v321, %v456
        %v458 = vpop.f32.mrf.mxu0
        %459 = vdwg.mxu0
        %v460 = vmax.f32 %v454, 0.0
        %v461 = vmax.f32 %v457, 0.0
        %v462 = vpack.c.bf16 %v461, %v460
        %v464 = vshrl.u32 %v462, 16
        %v466 = vrot.slane %v464, 7
        %v467 = vshll.u32 %v462, 16
        %v469 = vor.u32 %v466, %v467
        %vm471 = vcmask 1040384
        %vm472 = vsmask.f32 256
        %vm473 = vmand %vm471, %vm472
        %v474 = vsel %vm473, 0, %v469
        %v475 = vrot.slane %v467, 1
        %v476 = vor.u32 %v464, %v475
        %vm478 = vcmask 1047552
        %vm479 = vsmask.f32 7424
        %vm480 = vmand %vm478, %vm479
        %v481 = vsel %vm480, %v476, 0
        %483 = vrot.lane.b32.xlu0 %v462, 64
        %v484 = vpop.permute.xlu0 %483
        %vm485 = vcmask 523264
        %v488 = vsel %vm485, %v474, %v484
        %v490 = vld [vmem:[%s2] sm:$0xf]
        %v491 = vld [vmem:[%s2 + $0x4] sm:$0xf]
        %v492 = vld [vmem:[%s2 + $0x8] sm:$0xf]
        %v493 = vld [vmem:[%s2 + $0xc] sm:$0xf]
        %v494 = vld [vmem:[%s2 + $0x10] sm:$0xf]
        %v495 = vld [vmem:[%s2 + $0x14] sm:$0xf]
        %v496 = vld [vmem:[%s2 + $0x18] sm:$0xf]
        %v497 = vld [vmem:[%s2 + $0x1c] sm:$0xf]
        %v498 = vld [vmem:[%s2 + $0x20] sm:$0xf]
        %v499 = vld [vmem:[%s2 + $0x24] sm:$0xf]
        %v500 = vld [vmem:[%s2 + $0x28] sm:$0xf]
        %v501 = vld [vmem:[%s2 + $0x2c] sm:$0xf]
        %v502 = vld [vmem:[%s2 + $0x30] sm:$0xf]
        %v503 = vld [vmem:[%s2 + $0x34] sm:$0xf]
        %v504 = vld [vmem:[%s2 + $0x38] sm:$0xf]
        %v505 = vld [vmem:[%s2 + $0x3c] sm:$0xf]
        %v506 = vld [vmem:[%s2 + $0x40] sm:$0xf]
        %v507 = vld [vmem:[%s2 + $0x44] sm:$0xf]
        %v508 = vld [vmem:[%s2 + $0x48] sm:$0xf]
        %v509 = vld [vmem:[%s2 + $0x4c] sm:$0xf]
        %v510 = vld [vmem:[%s2 + $0x50] sm:$0xf]
        %v511 = vld [vmem:[%s2 + $0x54] sm:$0xf]
        %v512 = vld [vmem:[%s2 + $0x58] sm:$0xf]
        %v513 = vld [vmem:[%s2 + $0x5c] sm:$0xf]
        %v514 = vld [vmem:[%s5] sm:$0x1]
        %v516 = vlaneseq
        %v517 = vshrl.u32 %v516, 7
        %v518 = vsub.s32 0, %v517
        %v519 = vrot.slane %v514, %v518
        %v545 = vunpack.c.l.b16 %v490
        %v546 = vunpack.c.l.b16 %v491
        %v547 = vunpack.c.l.b16 %v492
        %v548 = vunpack.c.l.b16 %v493
        %v549 = vunpack.c.l.b16 %v494
        %v550 = vunpack.c.l.b16 %v495
        %v551 = vunpack.c.l.b16 %v496
        %v552 = vunpack.c.l.b16 %v497
        %v553 = vunpack.c.l.b16 %v498
        %v554 = vunpack.c.l.b16 %v499
        %v555 = vunpack.c.l.b16 %v500
        %v556 = vunpack.c.l.b16 %v501
        %v557 = vunpack.c.l.b16 %v502
        %v558 = vunpack.c.l.b16 %v503
        %v559 = vunpack.c.l.b16 %v504
        %v560 = vunpack.c.l.b16 %v505
        %v561 = vunpack.c.l.b16 %v506
        %v562 = vunpack.c.l.b16 %v507
        %v563 = vunpack.c.l.b16 %v508
        %v564 = vunpack.c.l.b16 %v509
        %v565 = vunpack.c.l.b16 %v510
        %v566 = vunpack.c.l.b16 %v511
        %v567 = vunpack.c.l.b16 %v512
        %v568 = vunpack.c.l.b16 %v513
        %v569 = vpack.c.b16 %v546, %v545
        %v570 = vpack.c.b16 %v548, %v547
        %v571 = vpack.c.b16 %v550, %v549
        %v572 = vpack.c.b16 %v552, %v551
        %v573 = vpack.c.b16 %v554, %v553
        %v574 = vpack.c.b16 %v556, %v555
        %v575 = vpack.c.b16 %v558, %v557
        %v576 = vpack.c.b16 %v560, %v559
        %v577 = vpack.c.b16 %v562, %v561
        %v578 = vpack.c.b16 %v564, %v563
        %v579 = vpack.c.b16 %v566, %v565
        %v580 = vpack.c.b16 %v568, %v567
        %v594 = vsel %vm485, %v481, 0
        %596 = vmatprep.subr.bf16.mxu0 0
        %597 = vmatpush1.bf16.msra.mxu0 %v576
        %598 = vmatprep.subr.bf16.mxu0 0
        %599 = vmatpush1.bf16.msra.mxu0 %v575
        %600 = vmatprep.subr.bf16.mxu0 0
        %601 = vmatpush1.bf16.msra.mxu0 %v574
        %602 = vmatprep.subr.bf16.mxu0 0
        %603 = vmatpush1.bf16.msra.mxu0 %v573
        %604 = vmatprep.subr.bf16.mxu0 0
        %605 = vmatpush1.bf16.msra.mxu0 %v572
        %606 = vmatprep.subr.bf16.mxu0 0
        %607 = vmatpush1.bf16.msra.mxu0 %v571
        %608 = vmatprep.subr.bf16.mxu0 0
        %609 = vmatpush1.bf16.msra.mxu0 %v570
        %610 = vmatprep.subr.bf16.mxu0 0
        %611 = vmatpush1.bf16.msra.mxu0 %v569
        %612 = vmatprep.subr.bf16.mxu0 0
        %613 = vmatpush2.bf16.msra.mxu0 0
        %614 = vmatprep.subr.bf16.mxu0 0
        %615 = vmatpush2.bf16.msra.mxu0 0
        %616 = vmatprep.subr.bf16.mxu0 0
        %617 = vmatpush2.bf16.msra.mxu0 0
        %618 = vmatprep.subr.bf16.mxu0 0
        %619 = vmatpush2.bf16.msra.mxu0 0
        %620 = vmatprep.subr.bf16.mxu0 0
        %621 = vmatpush2.bf16.msra.mxu0 %v580
        %622 = vmatprep.subr.bf16.mxu0 0
        %623 = vmatpush2.bf16.msra.mxu0 %v579
        %624 = vmatprep.subr.bf16.mxu0 0
        %625 = vmatpush2.bf16.msra.mxu0 %v578
        %626 = vmatprep.subr.bf16.mxu0 0
        %627 = vmatpush2.bf16.msra.mxu0 %v577
        %628 = vmatprep.mubr.bf16.mxu0 %v594
        %629 = vmatmul.mubr.bf16.gmra.mxu0 %v488
        %v630 = vpop.f32.mrf.mxu0
        %v631 = vadd.f32 %v519, %v630
        %v632 = vpop.f32.mrf.mxu0
        %v633 = vpop.f32.mrf.mxu0
        %v634 = vadd.f32 %v519, %v633
        %v635 = vpop.f32.mrf.mxu0
        %636 = vdwg.mxu0
        %v637 = vmax.f32 %v631, 0.0
        %v638 = vmax.f32 %v634, 0.0
        %v639 = vpack.c.bf16 %v638, %v637
        %v640 = vld [vmem:[%s3] sm:$0xff]
        %v641 = vld [vmem:[%s3 + $0x8] sm:$0xff]
        %v642 = vld [vmem:[%s3 + $0x10] sm:$0xff]
        %v643 = vld [vmem:[%s3 + $0x18] sm:$0xff]
        %v644 = vld [vmem:[%s3 + $0x20] sm:$0xff]
        %v645 = vld [vmem:[%s3 + $0x28] sm:$0xff]
        %v646 = vld [vmem:[%s3 + $0x30] sm:$0xff]
        %v647 = vld [vmem:[%s3 + $0x38] sm:$0xff]
        %v648 = vld [vmem:[%s6] sm:$0x3]
        %v650 = vlaneseq
        %v651 = vshrl.u32 %v650, 7
        %v652 = vsub.s32 0, %v651
        %v653 = vrot.slane %v648, %v652
        %v654 = vlaneseq
        %v655 = vshrl.u32 %v654, 7
        %v656 = vsub.s32 1, %v655
        %v657 = vrot.slane %v648, %v656
        %v668 = vunpack.c.l.b16 %v640
        %v669 = vunpack.c.h.b16 %v640
        %v670 = vunpack.c.l.b16 %v641
        %v671 = vunpack.c.h.b16 %v641
        %v672 = vunpack.c.l.b16 %v642
        %v673 = vunpack.c.h.b16 %v642
        %v674 = vunpack.c.l.b16 %v643
        %v675 = vunpack.c.h.b16 %v643
        %v676 = vunpack.c.l.b16 %v644
        %v677 = vunpack.c.h.b16 %v644
        %v678 = vunpack.c.l.b16 %v645
        %v679 = vunpack.c.h.b16 %v645
        %v680 = vunpack.c.l.b16 %v646
        %v681 = vunpack.c.h.b16 %v646
        %v682 = vunpack.c.l.b16 %v647
        %v683 = vunpack.c.h.b16 %v647
        %v684 = vpack.c.b16 %v670, %v668
        %v685 = vpack.c.b16 %v671, %v669
        %v686 = vpack.c.b16 %v674, %v672
        %v687 = vpack.c.b16 %v675, %v673
        %v688 = vpack.c.b16 %v678, %v676
        %v689 = vpack.c.b16 %v679, %v677
        %v690 = vpack.c.b16 %v682, %v680
        %v691 = vpack.c.b16 %v683, %v681
        %v701 = vsel %vm485, %v639, 0
        %703 = vmatprep.subr.bf16.mxu0 0
        %704 = vmatpush1.bf16.msra.mxu0 0
        %705 = vmatprep.subr.bf16.mxu0 0
        %706 = vmatpush1.bf16.msra.mxu0 0
        %707 = vmatprep.subr.bf16.mxu0 0
        %708 = vmatpush1.bf16.msra.mxu0 0
        %709 = vmatprep.subr.bf16.mxu0 0
        %710 = vmatpush1.bf16.msra.mxu0 0
        %711 = vmatprep.subr.bf16.mxu0 %v691
        %712 = vmatpush1.bf16.msra.mxu0 %v690
        %713 = vmatprep.subr.bf16.mxu0 %v689
        %714 = vmatpush1.bf16.msra.mxu0 %v688
        %715 = vmatprep.subr.bf16.mxu0 %v687
        %716 = vmatpush1.bf16.msra.mxu0 %v686
        %717 = vmatprep.subr.bf16.mxu0 %v685
        %718 = vmatpush1.bf16.msra.mxu0 %v684
        %719 = vmatprep.subr.bf16.mxu0 0
        %720 = vmatpush2.bf16.msra.mxu0 0
        %721 = vmatprep.subr.bf16.mxu0 0
        %722 = vmatpush2.bf16.msra.mxu0 0
        %723 = vmatprep.subr.bf16.mxu0 0
        %724 = vmatpush2.bf16.msra.mxu0 0
        %725 = vmatprep.subr.bf16.mxu0 0
        %726 = vmatpush2.bf16.msra.mxu0 0
        %727 = vmatprep.subr.bf16.mxu0 0
        %728 = vmatpush2.bf16.msra.mxu0 0
        %729 = vmatprep.subr.bf16.mxu0 0
        %730 = vmatpush2.bf16.msra.mxu0 0
        %731 = vmatprep.subr.bf16.mxu0 0
        %732 = vmatpush2.bf16.msra.mxu0 0
        %733 = vmatprep.subr.bf16.mxu0 0
        %734 = vmatpush2.bf16.msra.mxu0 0
        %735 = vmatprep.mubr.bf16.mxu0 0
        %736 = vmatmul.mubr.bf16.gmra.mxu0 %v701
        %v737 = vpop.f32.mrf.mxu0
        %v738 = vadd.f32 %v653, %v737
        %v739 = vpop.f32.mrf.mxu0
        %v740 = vadd.f32 %v657, %v739
        %v741 = vpop.f32.mrf.mxu0
        %v742 = vadd.f32 %v653, %v741
        %v743 = vpop.f32.mrf.mxu0
        %v744 = vadd.f32 %v657, %v743
        %745 = vdwg.mxu0
        %v746 = vadd.f32 %v738, %v278
        %v747 = vadd.f32 %v740, %v279
        %v748 = vadd.f32 %v742, %v280
        %v749 = vadd.f32 %v744, %v281
        %v750 = vmax.f32 %v746, 0.0
        %v751 = vmax.f32 %v747, 0.0
        %v752 = vmax.f32 %v748, 0.0
        %v753 = vmax.f32 %v749, 0.0
        %754 = vst [vmem:[%s271] sm:$0xff] %v750
        %755 = vst [vmem:[%s271 + $0x8] sm:$0xff] %v751
        %756 = vst [vmem:[%s271 + $0x10] sm:$0xff] %v752
        %757 = vst [vmem:[%s271 + $0x18] sm:$0xff] %v753
        %s758 = sand.u32 %s181, 1
        %s759 = scalar_lea.sflag [#allocation3], %s758
        %s760 = sand.u32 %s181, 1
        %s761 = smul.addr %s760, 32
        %s762 = scalar_lea.vmem [#allocation2], %s761
        // Predicated region
        $region49: #{tpu_custom_call.1} parent=47 // pred_check
          %p763 = pneg %p191
        $region50: #{tpu_custom_call.1} parent=47 // pred_check_branch
          %765 = sbr.rel (%p763) target = $region52
        $region51: #{tpu_custom_call.1} parent=47 // pred_region
          %s767 = ssub.s32 512, 512
          %768 = vsyncadd %s759, %s767
          %s769 = smul.addr %s21, 4
          %s770 = smul.addr %s769, 128
          %s771 = scalar_lea.hbm %s7, %s770
          %s772 = sshll.u32 %s762, 4
          %s773 = int_to_ptr.vmem [resolvable:$true] %s772
          %778 = dma.vmem_to_hbm [thread:$0]  %s773, 512, %s771, %s759, 256, 256, 16
        $region52: #{tpu_custom_call.1} parent=47 // pred_fallthru
          _
      $region48: #{tpu_custom_call.1} parent=5 // pred_fallthru
        _
      %p779 = scmp.le.s32.totalorder 2, %s16
      // Predicated region
      $region53: #{tpu_custom_call.1} parent=5 // pred_check
        %p780 = pneg %p779
      $region54: #{tpu_custom_call.1} parent=5 // pred_check_branch
        %782 = sbr.rel (%p780) target = $region56
      $region55: #{tpu_custom_call.1} parent=5 // pred_region
        %s783 = ssub.s32 %s16, 2
        // Predicated region
        $region57: #{tpu_custom_call.1} parent=55 // pred_check
          %p784 = pneg %p197
        $region58: #{tpu_custom_call.1} parent=55 // pred_check_branch
          %786 = sbr.rel (%p784) target = $region60
        $region59: #{tpu_custom_call.1} parent=55 // pred_region
          %s787 = sand.u32 %s182, 1
          %s788 = scalar_lea.sflag [#allocation3], %s787
          %s789 = sand.u32 %s182, 1
          %s790 = smul.addr %s789, 32
          %s791 = scalar_lea.vmem [#allocation2], %s790
          %792 = dma.done %s788, 512
        $region60: #{tpu_custom_call.1} parent=55 // pred_fallthru
          _
      $region56: #{tpu_custom_call.1} parent=5 // pred_fallthru
        _
    $region6: #{tpu_custom_call.1} parent=1 // loop_footer
      %s20 = sadd.s32 1, %s16
    $region7: #{tpu_custom_call.1} parent=1 // loop_footer_branch
      %15 = sbr.rel target = $region3
    $region8: #{tpu_custom_call.1} parent=1 // loop_exit
      _
    %793 = vsyncpa [#allocation3], 1
    %s794 = scalar_lea.sflag [#allocation3], 1
    %795 = vsyncpa %s794, 1

</llo_original>
